<compile_context>
chip_gen: v6e
topology: v6e:2x2x1
jax: 0.10.0
libtpu: 0.0.40
codegen_flags: <defaults>
</compile_context>

<pallas_src>
import jax
import jax.numpy as jnp
from jax.experimental import pallas as pl
from jax.experimental.pallas import tpu as pltpu


N_FEATURES = 7
N_OUTPUTS = 4
HIDDEN_NODES = 64       # nn.Module default
HIDDEN_LAYERS = 3       # -> 4 Linear layers total (in + 2 hidden + out)
LANE = 128
DEFAULT_TILE_B = 1024   # <= 2048 keeps v5e's 16 MiB scoped-VMEM default comfortable


def _mlp_kernel(x_ref,
                w0_ref, b0_ref,
                w1_ref, b1_ref,
                w2_ref, b2_ref,
                w3_ref, b3_ref,
                o_ref):
    cdt = w0_ref.dtype  # bf16 compute dtype for MXU operands

    x = x_ref[...]                                              # (7, TB) bf16

    # Layer 0: Linear(7 -> H) + ReLU   (Dropout == identity in eval)
    h = jnp.dot(w0_ref[...], x, preferred_element_type=jnp.float32) + b0_ref[...]
    h = jnp.maximum(h, 0.0)

    # Layer 1: Linear(H -> H) + ReLU
    h = jnp.dot(w1_ref[...], h.astype(cdt),
                preferred_element_type=jnp.float32) + b1_ref[...]
    h = jnp.maximum(h, 0.0)

    # Layer 2: Linear(H -> H) + ReLU
    h = jnp.dot(w2_ref[...], h.astype(cdt),
                preferred_element_type=jnp.float32) + b2_ref[...]
    h = jnp.maximum(h, 0.0)

    # Output layer: Linear(H -> 4), no activation
    y = jnp.dot(w3_ref[...], h.astype(cdt),
                preferred_element_type=jnp.float32) + b3_ref[...]

    o_ref[...] = y.astype(o_ref.dtype)                          # (4, TB) lane-dense


def migration_predictor_forward(x, params, tile_b=DEFAULT_TILE_B):
    """x: (B, 7) float32; params: w{i} of shape (out, in), b{i} of shape (out, 1)."""
    B = x.shape[0]
    H = params["w0"].shape[0]

    # Pad batch up to a lane multiple, pick a tile, make B_pad a tile multiple.
    b_pad = max(LANE, ((B + LANE - 1) // LANE) * LANE)
    tile_b = min(tile_b, b_pad)
    b_pad = ((b_pad + tile_b - 1) // tile_b) * tile_b
    n_tiles = b_pad // tile_b

    # Lane-dense layout: batch on lanes; bf16 MXU operands, f32 biases.
    x_t = jnp.pad(x.T.astype(jnp.bfloat16), ((0, 0), (0, b_pad - B)))   # (7, b_pad)
    w0 = params["w0"].astype(jnp.bfloat16)   # (H, 7)
    w1 = params["w1"].astype(jnp.bfloat16)   # (H, H)
    w2 = params["w2"].astype(jnp.bfloat16)   # (H, H)
    w3 = params["w3"].astype(jnp.bfloat16)   # (4, H)
    b0, b1, b2, b3 = params["b0"], params["b1"], params["b2"], params["b3"]

    const = lambda i: (0, 0)   # weights/biases: single resident block for every tile
    in_specs = [
        pl.BlockSpec((N_FEATURES, tile_b), lambda i: (0, i)),   # x^T, batch-tiled
        pl.BlockSpec((H, N_FEATURES), const),                   # w0
        pl.BlockSpec((H, 1), const),                            # b0
        pl.BlockSpec((H, H), const),                            # w1
        pl.BlockSpec((H, 1), const),                            # b1
        pl.BlockSpec((H, H), const),                            # w2
        pl.BlockSpec((H, 1), const),                            # b2
        pl.BlockSpec((N_OUTPUTS, H), const),                    # w3
        pl.BlockSpec((N_OUTPUTS, 1), const),                    # b3
    ]
    out_spec = pl.BlockSpec((N_OUTPUTS, tile_b), lambda i: (0, i))

    y_t = pl.pallas_call(
        _mlp_kernel,
        out_shape=jax.ShapeDtypeStruct((N_OUTPUTS, b_pad), jnp.float32),
        grid=(n_tiles,),
        in_specs=in_specs,
        out_specs=out_spec,
        compiler_params=pltpu.CompilerParams(
            dimension_semantics=("parallel",)),   # megacore-shard the batch axis (v7x)
    )(x_t, w0, b0, w1, b1, w2, b2, w3, b3)

    return y_t[:, :B].T   # (B, 4)


def init_params(key, hidden_nodes=HIDDEN_NODES, hidden_layers=HIDDEN_LAYERS):
    """nn.Linear-style init U(-1/sqrt(fan_in), 1/sqrt(fan_in)); weights (out, in)."""
    dims = [(hidden_nodes, N_FEATURES)]
    dims += [(hidden_nodes, hidden_nodes)] * (hidden_layers - 1)
    dims += [(N_OUTPUTS, hidden_nodes)]
    params = {}
    for i, (fan_out, fan_in) in enumerate(dims):
        key, kw, kb = jax.random.split(key, 3)
        bound = 1.0 / (float(fan_in) ** 0.5)
        params[f"w{i}"] = jax.random.uniform(
            kw, (fan_out, fan_in), jnp.float32, minval=-bound, maxval=bound)
        params[f"b{i}"] = jax.random.uniform(
            kb, (fan_out, 1), jnp.float32, minval=-bound, maxval=bound)
    return params


def _reference_forward_f32(x, params):
    h = x
    for i in range(3):
        h = jnp.maximum(h @ params[f"w{i}"].T + params[f"b{i}"].T, 0.0)
    return h @ params["w3"].T + params["b3"].T


def _reference_forward_bf16(x, params):
    """Matches the kernel's numerics: bf16 MXU operands, f32 accum/bias/ReLU."""
    h = x.astype(jnp.bfloat16)
    for i in range(4):
        w = params[f"w{i}"].astype(jnp.bfloat16)
        z = jnp.dot(h, w.T, preferred_element_type=jnp.float32) + params[f"b{i}"].T
        if i < 3:
            h = jnp.maximum(z, 0.0).astype(jnp.bfloat16)
        else:
            h = z
    return h


if __name__ == "__main__":
    key = jax.random.PRNGKey(0)
    key, kx = jax.random.split(key)

    B = 8
    x = jax.random.normal(kx, (B, N_FEATURES), dtype=jnp.float32)
    params = init_params(key)

    out = jax.block_until_ready(migration_predictor_forward(x, params))
    assert out.shape == (B, N_OUTPUTS)

    ref_bf16 = _reference_forward_bf16(x, params)
    ref_f32 = _reference_forward_f32(x, params)
    assert jnp.allclose(out, ref_bf16, atol=1e-2, rtol=1e-2)   # same-precision check
    assert jnp.allclose(out, ref_f32, atol=5e-2, rtol=5e-2)    # semantic check vs f32

    print("KERNEL_OK")
</pallas_src>

<mosaic_0001>
module attributes {stable_mosaic.version = 11 : i64} {
  func.func @_mlp_kernel(%arg0: i32, %arg1: memref<7x128xbf16, #tpu.memory_space<vmem>>, %arg2: memref<64x7xbf16, #tpu.memory_space<vmem>>, %arg3: memref<64x1xf32, #tpu.memory_space<vmem>>, %arg4: memref<64x64xbf16, #tpu.memory_space<vmem>>, %arg5: memref<64x1xf32, #tpu.memory_space<vmem>>, %arg6: memref<64x64xbf16, #tpu.memory_space<vmem>>, %arg7: memref<64x1xf32, #tpu.memory_space<vmem>>, %arg8: memref<4x64xbf16, #tpu.memory_space<vmem>>, %arg9: memref<4x1xf32, #tpu.memory_space<vmem>>, %arg10: memref<4x128xf32, #tpu.memory_space<vmem>>) attributes {dimension_semantics = [#tpu.dimension_semantics<parallel>], iteration_bounds = array<i64: 1>, scalar_prefetch = 0 : i64, scratch_operands = 0 : i64, tpu.core_type = #tpu.core_type<tc>, window_params = [{transform_indices = @transform_0, window_bounds = array<i64: 7, 128>}, {pipeline_mode = #tpu.pipeline_mode<synchronous>, transform_indices = @transform_1, window_bounds = array<i64: 64, 7>}, {pipeline_mode = #tpu.pipeline_mode<synchronous>, transform_indices = @transform_2, window_bounds = array<i64: 64, 1>}, {pipeline_mode = #tpu.pipeline_mode<synchronous>, transform_indices = @transform_3, window_bounds = array<i64: 64, 64>}, {pipeline_mode = #tpu.pipeline_mode<synchronous>, transform_indices = @transform_4, window_bounds = array<i64: 64, 1>}, {pipeline_mode = #tpu.pipeline_mode<synchronous>, transform_indices = @transform_5, window_bounds = array<i64: 64, 64>}, {pipeline_mode = #tpu.pipeline_mode<synchronous>, transform_indices = @transform_6, window_bounds = array<i64: 64, 1>}, {pipeline_mode = #tpu.pipeline_mode<synchronous>, transform_indices = @transform_7, window_bounds = array<i64: 4, 64>}, {pipeline_mode = #tpu.pipeline_mode<synchronous>, transform_indices = @transform_8, window_bounds = array<i64: 4, 1>}, {transform_indices = @transform_9, window_bounds = array<i64: 4, 128>}]} {
    %c0 = arith.constant 0 : index
    %c0_0 = arith.constant 0 : index
    %0 = vector.load %arg1[%c0, %c0_0] : memref<7x128xbf16, #tpu.memory_space<vmem>>, vector<7x128xbf16>
    %c0_1 = arith.constant 0 : index
    %c0_2 = arith.constant 0 : index
    %1 = vector.load %arg2[%c0_1, %c0_2] : memref<64x7xbf16, #tpu.memory_space<vmem>>, vector<64x7xbf16>
    %cst = arith.constant dense<0.000000e+00> : vector<64x128xf32>
    %2 = tpu.matmul %1, %0, %cst {dimension_numbers = #tpu.dot_dimension_numbers<[1], [0], [0], [1], [0, 0, 1, 1], [], []>} : vector<64x7xbf16>, vector<7x128xbf16>, vector<64x128xf32> -> vector<64x128xf32>
    %c0_3 = arith.constant 0 : index
    %c0_4 = arith.constant 0 : index
    %3 = vector.load %arg3[%c0_3, %c0_4] : memref<64x1xf32, #tpu.memory_space<vmem>>, vector<64x1xf32>
    %4 = vector.broadcast %3 : vector<64x1xf32> to vector<64x128xf32>
    %5 = arith.addf %2, %4 : vector<64x128xf32>
    %cst_5 = arith.constant 0.000000e+00 : f32
    %6 = vector.broadcast %cst_5 : f32 to vector<64x128xf32>
    %7 = arith.maximumf %5, %6 : vector<64x128xf32>
    %c0_6 = arith.constant 0 : index
    %c0_7 = arith.constant 0 : index
    %8 = vector.load %arg4[%c0_6, %c0_7] : memref<64x64xbf16, #tpu.memory_space<vmem>>, vector<64x64xbf16>
    %9 = arith.truncf %7 : vector<64x128xf32> to vector<64x128xbf16>
    %cst_8 = arith.constant dense<0.000000e+00> : vector<64x128xf32>
    %10 = tpu.matmul %8, %9, %cst_8 {dimension_numbers = #tpu.dot_dimension_numbers<[1], [0], [0], [1], [0, 0, 1, 1], [], []>} : vector<64x64xbf16>, vector<64x128xbf16>, vector<64x128xf32> -> vector<64x128xf32>
    %c0_9 = arith.constant 0 : index
    %c0_10 = arith.constant 0 : index
    %11 = vector.load %arg5[%c0_9, %c0_10] : memref<64x1xf32, #tpu.memory_space<vmem>>, vector<64x1xf32>
    %12 = vector.broadcast %11 : vector<64x1xf32> to vector<64x128xf32>
    %13 = arith.addf %10, %12 : vector<64x128xf32>
    %cst_11 = arith.constant 0.000000e+00 : f32
    %14 = vector.broadcast %cst_11 : f32 to vector<64x128xf32>
    %15 = arith.maximumf %13, %14 : vector<64x128xf32>
    %c0_12 = arith.constant 0 : index
    %c0_13 = arith.constant 0 : index
    %16 = vector.load %arg6[%c0_12, %c0_13] : memref<64x64xbf16, #tpu.memory_space<vmem>>, vector<64x64xbf16>
    %17 = arith.truncf %15 : vector<64x128xf32> to vector<64x128xbf16>
    %cst_14 = arith.constant dense<0.000000e+00> : vector<64x128xf32>
    %18 = tpu.matmul %16, %17, %cst_14 {dimension_numbers = #tpu.dot_dimension_numbers<[1], [0], [0], [1], [0, 0, 1, 1], [], []>} : vector<64x64xbf16>, vector<64x128xbf16>, vector<64x128xf32> -> vector<64x128xf32>
    %c0_15 = arith.constant 0 : index
    %c0_16 = arith.constant 0 : index
    %19 = vector.load %arg7[%c0_15, %c0_16] : memref<64x1xf32, #tpu.memory_space<vmem>>, vector<64x1xf32>
    %20 = vector.broadcast %19 : vector<64x1xf32> to vector<64x128xf32>
    %21 = arith.addf %18, %20 : vector<64x128xf32>
    %cst_17 = arith.constant 0.000000e+00 : f32
    %22 = vector.broadcast %cst_17 : f32 to vector<64x128xf32>
    %23 = arith.maximumf %21, %22 : vector<64x128xf32>
    %c0_18 = arith.constant 0 : index
    %c0_19 = arith.constant 0 : index
    %24 = vector.load %arg8[%c0_18, %c0_19] : memref<4x64xbf16, #tpu.memory_space<vmem>>, vector<4x64xbf16>
    %25 = arith.truncf %23 : vector<64x128xf32> to vector<64x128xbf16>
    %cst_20 = arith.constant dense<0.000000e+00> : vector<4x128xf32>
    %26 = tpu.matmul %24, %25, %cst_20 {dimension_numbers = #tpu.dot_dimension_numbers<[1], [0], [0], [1], [0, 0, 1, 1], [], []>} : vector<4x64xbf16>, vector<64x128xbf16>, vector<4x128xf32> -> vector<4x128xf32>
    %c0_21 = arith.constant 0 : index
    %c0_22 = arith.constant 0 : index
    %27 = vector.load %arg9[%c0_21, %c0_22] : memref<4x1xf32, #tpu.memory_space<vmem>>, vector<4x1xf32>
    %28 = vector.broadcast %27 : vector<4x1xf32> to vector<4x128xf32>
    %29 = arith.addf %26, %28 : vector<4x128xf32>
    %c0_23 = arith.constant 0 : index
    %c0_24 = arith.constant 0 : index
    %30 = vector.load %arg10[%c0_23, %c0_24] : memref<4x128xf32, #tpu.memory_space<vmem>>, vector<4x128xf32>
    tpu.vector_store %arg10[%c0_23, %c0_24], %29 {strides = array<i32>} : memref<4x128xf32, #tpu.memory_space<vmem>>, vector<4x128xf32>,
    return
  }
  func.func @transform_0(%arg0: i32) -> (i32, i32) {
    %c0_i32 = arith.constant 0 : i32
    %c0_i32_0 = arith.constant 0 : i32
    return %c0_i32, %arg0 : i32, i32
  }
  func.func @transform_1(%arg0: i32) -> (i32, i32) {
    %c0_i32 = arith.constant 0 : i32
    %c0_i32_0 = arith.constant 0 : i32
    %c0_i32_1 = arith.constant 0 : i32
    return %c0_i32, %c0_i32_0 : i32, i32
  }
  func.func @transform_2(%arg0: i32) -> (i32, i32) {
    %c0_i32 = arith.constant 0 : i32
    %c0_i32_0 = arith.constant 0 : i32
    %c0_i32_1 = arith.constant 0 : i32
    return %c0_i32, %c0_i32_0 : i32, i32
  }
  func.func @transform_3(%arg0: i32) -> (i32, i32) {
    %c0_i32 = arith.constant 0 : i32
    %c0_i32_0 = arith.constant 0 : i32
    %c0_i32_1 = arith.constant 0 : i32
    return %c0_i32, %c0_i32_0 : i32, i32
  }
  func.func @transform_4(%arg0: i32) -> (i32, i32) {
    %c0_i32 = arith.constant 0 : i32
    %c0_i32_0 = arith.constant 0 : i32
    %c0_i32_1 = arith.constant 0 : i32
    return %c0_i32, %c0_i32_0 : i32, i32
  }
  func.func @transform_5(%arg0: i32) -> (i32, i32) {
    %c0_i32 = arith.constant 0 : i32
    %c0_i32_0 = arith.constant 0 : i32
    %c0_i32_1 = arith.constant 0 : i32
    return %c0_i32, %c0_i32_0 : i32, i32
  }
  func.func @transform_6(%arg0: i32) -> (i32, i32) {
    %c0_i32 = arith.constant 0 : i32
    %c0_i32_0 = arith.constant 0 : i32
    %c0_i32_1 = arith.constant 0 : i32
    return %c0_i32, %c0_i32_0 : i32, i32
  }
  func.func @transform_7(%arg0: i32) -> (i32, i32) {
    %c0_i32 = arith.constant 0 : i32
    %c0_i32_0 = arith.constant 0 : i32
    %c0_i32_1 = arith.constant 0 : i32
    return %c0_i32, %c0_i32_0 : i32, i32
  }
  func.func @transform_8(%arg0: i32) -> (i32, i32) {
    %c0_i32 = arith.constant 0 : i32
    %c0_i32_0 = arith.constant 0 : i32
    %c0_i32_1 = arith.constant 0 : i32
    return %c0_i32, %c0_i32_0 : i32, i32
  }
  func.func @transform_9(%arg0: i32) -> (i32, i32) {
    %c0_i32 = arith.constant 0 : i32
    %c0_i32_0 = arith.constant 0 : i32
    return %c0_i32, %arg0 : i32, i32
  }
}

</mosaic_0001>

<llo_original>
// kernel: tpu_custom_call.1
$region0: #{tpu_custom_call.1}
  #allocation0 [shape = 'u32[]', space=smem, size = 0x4, offset = 0x4, fixed_abs, tag = 'smem constant byte address 0x4 - core index']
  #allocation1 [shape = 'u32[144,128]{1,0:T(1,128)}', space=vmem, size = 0x12000, scoped, tag = 'internal scratch']
  %s0 = inlined_call_operand.vmem [shape: bf16[7,128], index: 0, kind: input, shape index: {}]
  %s1 = inlined_call_operand.vmem [shape: bf16[64,7], index: 1, kind: input, shape index: {}]
  %s2 = inlined_call_operand.vmem [shape: f32[64,1], index: 2, kind: input, shape index: {}]
  %s3 = inlined_call_operand.vmem [shape: bf16[64,64], index: 3, kind: input, shape index: {}]
  %s4 = inlined_call_operand.vmem [shape: f32[64,1], index: 4, kind: input, shape index: {}]
  %s5 = inlined_call_operand.vmem [shape: bf16[64,64], index: 5, kind: input, shape index: {}]
  %s6 = inlined_call_operand.vmem [shape: f32[64,1], index: 6, kind: input, shape index: {}]
  %s7 = inlined_call_operand.vmem [shape: bf16[4,64], index: 7, kind: input, shape index: {}]
  %s8 = inlined_call_operand.vmem [shape: f32[4,1], index: 8, kind: input, shape index: {}]
  %s9 = inlined_call_operand.hbm [shape: f32[4,128], index: 9, kind: output, shape index: {}]
  %s10 = sld [smem:[#allocation0]]
  $region46: #{tpu_custom_call.1} parent=0
    _
  %s12 = ssub.s32 1, %s10
  %s13 = scalar_select 0, %s12, %s10
  $region1: #{tpu_custom_call.1} parent=0
    #allocation2 [shape = 'u8[2048]{0}', space=vmem, size = 0x800, scoped, tag = 'output window, operand 0, single buffered']
    #allocation3 [shape = 's32[1]{0}', space=sflag, size = 0x4, scoped, tag = 'scoped memory for tpu_custom_call.1']
    %14 = vsyncpa [#allocation3], 0
    // Predicated region
    $region2: #{tpu_custom_call.1} parent=1 // pred_check
      _
    $region3: #{tpu_custom_call.1} parent=1 // pred_check_branch
      %16 = sbr.rel (0) target = $region5
    $region4: #{tpu_custom_call.1} parent=1 // pred_region
      _
    $region5: #{tpu_custom_call.1} parent=1 // pred_fallthru
      _
    // Predicated region
    $region6: #{tpu_custom_call.1} parent=1 // pred_check
      _
    $region7: #{tpu_custom_call.1} parent=1 // pred_check_branch
      %18 = sbr.rel (0) target = $region9
    $region8: #{tpu_custom_call.1} parent=1 // pred_region
      _
    $region9: #{tpu_custom_call.1} parent=1 // pred_fallthru
      _
    // Predicated region
    $region10: #{tpu_custom_call.1} parent=1 // pred_check
      _
    $region11: #{tpu_custom_call.1} parent=1 // pred_check_branch
      %20 = sbr.rel (0) target = $region13
    $region12: #{tpu_custom_call.1} parent=1 // pred_region
      _
    $region13: #{tpu_custom_call.1} parent=1 // pred_fallthru
      _
    // Predicated region
    $region14: #{tpu_custom_call.1} parent=1 // pred_check
      _
    $region15: #{tpu_custom_call.1} parent=1 // pred_check_branch
      %22 = sbr.rel (0) target = $region17
    $region16: #{tpu_custom_call.1} parent=1 // pred_region
      _
    $region17: #{tpu_custom_call.1} parent=1 // pred_fallthru
      _
    // Predicated region
    $region18: #{tpu_custom_call.1} parent=1 // pred_check
      _
    $region19: #{tpu_custom_call.1} parent=1 // pred_check_branch
      %24 = sbr.rel (0) target = $region21
    $region20: #{tpu_custom_call.1} parent=1 // pred_region
      _
    $region21: #{tpu_custom_call.1} parent=1 // pred_fallthru
      _
    // Predicated region
    $region22: #{tpu_custom_call.1} parent=1 // pred_check
      _
    $region23: #{tpu_custom_call.1} parent=1 // pred_check_branch
      %26 = sbr.rel (0) target = $region25
    $region24: #{tpu_custom_call.1} parent=1 // pred_region
      _
    $region25: #{tpu_custom_call.1} parent=1 // pred_fallthru
      _
    // Predicated region
    $region26: #{tpu_custom_call.1} parent=1 // pred_check
      _
    $region27: #{tpu_custom_call.1} parent=1 // pred_check_branch
      %28 = sbr.rel (0) target = $region29
    $region28: #{tpu_custom_call.1} parent=1 // pred_region
      _
    $region29: #{tpu_custom_call.1} parent=1 // pred_fallthru
      _
    // Predicated region
    $region30: #{tpu_custom_call.1} parent=1 // pred_check
      _
    $region31: #{tpu_custom_call.1} parent=1 // pred_check_branch
      %30 = sbr.rel (0) target = $region33
    $region32: #{tpu_custom_call.1} parent=1 // pred_region
      _
    $region33: #{tpu_custom_call.1} parent=1 // pred_fallthru
      _
    // Predicated region
    $region34: #{tpu_custom_call.1} parent=1 // pred_check
      _
    $region35: #{tpu_custom_call.1} parent=1 // pred_check_branch
      %32 = sbr.rel (0) target = $region37
    $region36: #{tpu_custom_call.1} parent=1 // pred_region
      _
    $region37: #{tpu_custom_call.1} parent=1 // pred_fallthru
      _
    %v34 = vld [vmem:[%s0] sm:$0xf]
    %v35 = vld [vmem:[%s1] sm:$0xf]
    %v36 = vld [vmem:[%s1 + $0x4] sm:$0xf]
    %v37 = vld [vmem:[%s1 + $0x8] sm:$0xf]
    %v38 = vld [vmem:[%s1 + $0xc] sm:$0xf]
    %v39 = vld [vmem:[%s1 + $0x10] sm:$0xf]
    %v40 = vld [vmem:[%s1 + $0x14] sm:$0xf]
    %v41 = vld [vmem:[%s1 + $0x18] sm:$0xf]
    %v42 = vld [vmem:[%s1 + $0x1c] sm:$0xf]
    %v43 = vld [vmem:[%s2] sm:$0xff]
    %v44 = vld [vmem:[%s2 + $0x8] sm:$0xff]
    %v45 = vld [vmem:[%s2 + $0x10] sm:$0xff]
    %v46 = vld [vmem:[%s2 + $0x18] sm:$0xff]
    %v47 = vld [vmem:[%s2 + $0x20] sm:$0xff]
    %v48 = vld [vmem:[%s2 + $0x28] sm:$0xff]
    %v49 = vld [vmem:[%s2 + $0x30] sm:$0xff]
    %v50 = vld [vmem:[%s2 + $0x38] sm:$0xff]
    %52 = vset.pattern.permute.xlu0 0
    %53 = vperm.xlu0 %52, %v43
    %v54 = vpop.permute.xlu0 %53
    %57 = vset.pattern.permute.xlu0 0
    %58 = vperm.xlu0 %57, %v44
    %v59 = vpop.permute.xlu0 %58
    %62 = vset.pattern.permute.xlu0 0
    %63 = vperm.xlu0 %62, %v45
    %v64 = vpop.permute.xlu0 %63
    %67 = vset.pattern.permute.xlu0 0
    %68 = vperm.xlu0 %67, %v46
    %v69 = vpop.permute.xlu0 %68
    %72 = vset.pattern.permute.xlu0 0
    %73 = vperm.xlu0 %72, %v47
    %v74 = vpop.permute.xlu0 %73
    %77 = vset.pattern.permute.xlu0 0
    %78 = vperm.xlu0 %77, %v48
    %v79 = vpop.permute.xlu0 %78
    %82 = vset.pattern.permute.xlu0 0
    %83 = vperm.xlu0 %82, %v49
    %v84 = vpop.permute.xlu0 %83
    %87 = vset.pattern.permute.xlu0 0
    %88 = vperm.xlu0 %87, %v50
    %v89 = vpop.permute.xlu0 %88
    %v99 = vunpack.c.l.b16 %v35
    %v100 = vunpack.c.l.b16 %v36
    %v101 = vunpack.c.l.b16 %v37
    %v102 = vunpack.c.l.b16 %v38
    %v103 = vunpack.c.l.b16 %v39
    %v104 = vunpack.c.l.b16 %v40
    %v105 = vunpack.c.l.b16 %v41
    %v106 = vunpack.c.l.b16 %v42
    %v107 = vpack.c.b16 %v100, %v99
    %v108 = vpack.c.b16 %v102, %v101
    %v109 = vpack.c.b16 %v104, %v103
    %v110 = vpack.c.b16 %v106, %v105
    %vm111 = vcmask 56320
    %v113 = vsel %vm111, %v107, 0
    %v116 = vsel %vm111, %v108, 0
    %v119 = vsel %vm111, %v109, 0
    %v122 = vsel %vm111, %v110, 0
    %vm124 = vcmask 1042432
    %vm125 = vcmask 1043456
    %v126 = vsel %vm124, 4294967295, 65535
    %v127 = vsel %vm125, %v126, 0
    %v129 = vand.u32 %v34, %v127
    %131 = vmatprep.subr.bf16.mxu0 0
    %132 = vmatpush1.bf16.msra.mxu0 0
    %133 = vmatprep.subr.bf16.mxu0 0
    %134 = vmatpush1.bf16.msra.mxu0 0
    %135 = vmatprep.subr.bf16.mxu0 0
    %136 = vmatpush1.bf16.msra.mxu0 0
    %137 = vmatprep.subr.bf16.mxu0 0
    %138 = vmatpush1.bf16.msra.mxu0 0
    %139 = vmatprep.subr.bf16.mxu0 0
    %140 = vmatpush1.bf16.msra.mxu0 0
    %141 = vmatprep.subr.bf16.mxu0 0
    %142 = vmatpush1.bf16.msra.mxu0 0
    %143 = vmatprep.subr.bf16.mxu0 0
    %144 = vmatpush1.bf16.msra.mxu0 0
    %145 = vmatprep.subr.bf16.mxu0 0
    %146 = vmatpush1.bf16.msra.mxu0 %v129
    %147 = vmatprep.subr.bf16.mxu0 0
    %148 = vmatpush2.bf16.msra.mxu0 0
    %149 = vmatprep.subr.bf16.mxu0 0
    %150 = vmatpush2.bf16.msra.mxu0 0
    %151 = vmatprep.subr.bf16.mxu0 0
    %152 = vmatpush2.bf16.msra.mxu0 0
    %153 = vmatprep.subr.bf16.mxu0 0
    %154 = vmatpush2.bf16.msra.mxu0 0
    %155 = vmatprep.subr.bf16.mxu0 0
    %156 = vmatpush2.bf16.msra.mxu0 0
    %157 = vmatprep.subr.bf16.mxu0 0
    %158 = vmatpush2.bf16.msra.mxu0 0
    %159 = vmatprep.subr.bf16.mxu0 0
    %160 = vmatpush2.bf16.msra.mxu0 0
    %161 = vmatprep.subr.bf16.mxu0 0
    %162 = vmatpush2.bf16.msra.mxu0 0
    %163 = vmatprep.mubr.bf16.mxu0 0
    %164 = vmatmul.mubr.bf16.gmra.mxu0 %v113
    %v165 = vpop.f32.mrf.mxu0
    %v166 = vadd.f32 %v54, %v165
    %v167 = vpop.f32.mrf.mxu0
    %v168 = vpop.f32.mrf.mxu0
    %v169 = vadd.f32 %v59, %v168
    %v170 = vpop.f32.mrf.mxu0
    %171 = vmatprep.mubr.bf16.mxu0 0
    %172 = vmatmul.mubr.bf16.gmra.mxu0 %v116
    %v173 = vpop.f32.mrf.mxu0
    %v174 = vadd.f32 %v64, %v173
    %v175 = vpop.f32.mrf.mxu0
    %v176 = vpop.f32.mrf.mxu0
    %v177 = vadd.f32 %v69, %v176
    %v178 = vpop.f32.mrf.mxu0
    %179 = vmatprep.mubr.bf16.mxu0 0
    %180 = vmatmul.mubr.bf16.gmra.mxu0 %v119
    %v181 = vpop.f32.mrf.mxu0
    %v182 = vadd.f32 %v74, %v181
    %v183 = vpop.f32.mrf.mxu0
    %v184 = vpop.f32.mrf.mxu0
    %v185 = vadd.f32 %v79, %v184
    %v186 = vpop.f32.mrf.mxu0
    %187 = vmatprep.mubr.bf16.mxu0 0
    %188 = vmatmul.mubr.bf16.gmra.mxu0 %v122
    %v189 = vpop.f32.mrf.mxu0
    %v190 = vadd.f32 %v84, %v189
    %v191 = vpop.f32.mrf.mxu0
    %v192 = vpop.f32.mrf.mxu0
    %v193 = vadd.f32 %v89, %v192
    %v194 = vpop.f32.mrf.mxu0
    %195 = vdwg.mxu0
    %v196 = vmax.f32 %v166, 0.0
    %v197 = vmax.f32 %v169, 0.0
    %v198 = vmax.f32 %v174, 0.0
    %v199 = vmax.f32 %v177, 0.0
    %v200 = vmax.f32 %v182, 0.0
    %v201 = vmax.f32 %v185, 0.0
    %v202 = vmax.f32 %v190, 0.0
    %v203 = vmax.f32 %v193, 0.0
    %v204 = vld [vmem:[%s3] sm:$0xf]
    %v205 = vld [vmem:[%s3 + $0x4] sm:$0xf]
    %v206 = vld [vmem:[%s3 + $0x8] sm:$0xf]
    %v207 = vld [vmem:[%s3 + $0xc] sm:$0xf]
    %v208 = vld [vmem:[%s3 + $0x10] sm:$0xf]
    %v209 = vld [vmem:[%s3 + $0x14] sm:$0xf]
    %v210 = vld [vmem:[%s3 + $0x18] sm:$0xf]
    %v211 = vld [vmem:[%s3 + $0x1c] sm:$0xf]
    %v212 = vpack.c.bf16 %v197, %v196
    %v213 = vpack.c.bf16 %v199, %v198
    %v214 = vpack.c.bf16 %v201, %v200
    %v215 = vpack.c.bf16 %v203, %v202
    %v216 = vld [vmem:[%s4] sm:$0xff]
    %v217 = vld [vmem:[%s4 + $0x8] sm:$0xff]
    %v218 = vld [vmem:[%s4 + $0x10] sm:$0xff]
    %v219 = vld [vmem:[%s4 + $0x18] sm:$0xff]
    %v220 = vld [vmem:[%s4 + $0x20] sm:$0xff]
    %v221 = vld [vmem:[%s4 + $0x28] sm:$0xff]
    %v222 = vld [vmem:[%s4 + $0x30] sm:$0xff]
    %v223 = vld [vmem:[%s4 + $0x38] sm:$0xff]
    %225 = vset.pattern.permute.xlu0 0
    %226 = vperm.xlu0 %225, %v216
    %v227 = vpop.permute.xlu0 %226
    %230 = vset.pattern.permute.xlu0 0
    %231 = vperm.xlu0 %230, %v217
    %v232 = vpop.permute.xlu0 %231
    %235 = vset.pattern.permute.xlu0 0
    %236 = vperm.xlu0 %235, %v218
    %v237 = vpop.permute.xlu0 %236
    %240 = vset.pattern.permute.xlu0 0
    %241 = vperm.xlu0 %240, %v219
    %v242 = vpop.permute.xlu0 %241
    %245 = vset.pattern.permute.xlu0 0
    %246 = vperm.xlu0 %245, %v220
    %v247 = vpop.permute.xlu0 %246
    %250 = vset.pattern.permute.xlu0 0
    %251 = vperm.xlu0 %250, %v221
    %v252 = vpop.permute.xlu0 %251
    %255 = vset.pattern.permute.xlu0 0
    %256 = vperm.xlu0 %255, %v222
    %v257 = vpop.permute.xlu0 %256
    %260 = vset.pattern.permute.xlu0 0
    %261 = vperm.xlu0 %260, %v223
    %v262 = vpop.permute.xlu0 %261
    %v272 = vunpack.c.l.b16 %v204
    %v273 = vunpack.c.l.b16 %v205
    %v274 = vunpack.c.l.b16 %v206
    %v275 = vunpack.c.l.b16 %v207
    %v276 = vunpack.c.l.b16 %v208
    %v277 = vunpack.c.l.b16 %v209
    %v278 = vunpack.c.l.b16 %v210
    %v279 = vunpack.c.l.b16 %v211
    %v280 = vpack.c.b16 %v273, %v272
    %v281 = vpack.c.b16 %v275, %v274
    %v282 = vpack.c.b16 %v277, %v276
    %v283 = vpack.c.b16 %v279, %v278
    %vm284 = vcmask 523264
    %v286 = vsel %vm284, %v280, 0
    %v289 = vsel %vm284, %v281, 0
    %v292 = vsel %vm284, %v282, 0
    %v295 = vsel %vm284, %v283, 0
    %297 = vmatprep.subr.bf16.mxu0 0
    %298 = vmatpush1.bf16.msra.mxu0 0
    %299 = vmatprep.subr.bf16.mxu0 0
    %300 = vmatpush1.bf16.msra.mxu0 0
    %301 = vmatprep.subr.bf16.mxu0 0
    %302 = vmatpush1.bf16.msra.mxu0 0
    %303 = vmatprep.subr.bf16.mxu0 0
    %304 = vmatpush1.bf16.msra.mxu0 0
    %305 = vmatprep.subr.bf16.mxu0 0
    %306 = vmatpush1.bf16.msra.mxu0 %v215
    %307 = vmatprep.subr.bf16.mxu0 0
    %308 = vmatpush1.bf16.msra.mxu0 %v214
    %309 = vmatprep.subr.bf16.mxu0 0
    %310 = vmatpush1.bf16.msra.mxu0 %v213
    %311 = vmatprep.subr.bf16.mxu0 0
    %312 = vmatpush1.bf16.msra.mxu0 %v212
    %313 = vmatprep.subr.bf16.mxu0 0
    %314 = vmatpush2.bf16.msra.mxu0 0
    %315 = vmatprep.subr.bf16.mxu0 0
    %316 = vmatpush2.bf16.msra.mxu0 0
    %317 = vmatprep.subr.bf16.mxu0 0
    %318 = vmatpush2.bf16.msra.mxu0 0
    %319 = vmatprep.subr.bf16.mxu0 0
    %320 = vmatpush2.bf16.msra.mxu0 0
    %321 = vmatprep.subr.bf16.mxu0 0
    %322 = vmatpush2.bf16.msra.mxu0 0
    %323 = vmatprep.subr.bf16.mxu0 0
    %324 = vmatpush2.bf16.msra.mxu0 0
    %325 = vmatprep.subr.bf16.mxu0 0
    %326 = vmatpush2.bf16.msra.mxu0 0
    %327 = vmatprep.subr.bf16.mxu0 0
    %328 = vmatpush2.bf16.msra.mxu0 0
    %329 = vmatprep.mubr.bf16.mxu0 0
    %330 = vmatmul.mubr.bf16.gmra.mxu0 %v286
    %v331 = vpop.f32.mrf.mxu0
    %v332 = vadd.f32 %v227, %v331
    %v333 = vpop.f32.mrf.mxu0
    %v334 = vpop.f32.mrf.mxu0
    %v335 = vadd.f32 %v232, %v334
    %v336 = vpop.f32.mrf.mxu0
    %337 = vmatprep.mubr.bf16.mxu0 0
    %338 = vmatmul.mubr.bf16.gmra.mxu0 %v289
    %v339 = vpop.f32.mrf.mxu0
    %v340 = vadd.f32 %v237, %v339
    %v341 = vpop.f32.mrf.mxu0
    %v342 = vpop.f32.mrf.mxu0
    %v343 = vadd.f32 %v242, %v342
    %v344 = vpop.f32.mrf.mxu0
    %345 = vmatprep.mubr.bf16.mxu0 0
    %346 = vmatmul.mubr.bf16.gmra.mxu0 %v292
    %v347 = vpop.f32.mrf.mxu0
    %v348 = vadd.f32 %v247, %v347
    %v349 = vpop.f32.mrf.mxu0
    %v350 = vpop.f32.mrf.mxu0
    %v351 = vadd.f32 %v252, %v350
    %v352 = vpop.f32.mrf.mxu0
    %353 = vmatprep.mubr.bf16.mxu0 0
    %354 = vmatmul.mubr.bf16.gmra.mxu0 %v295
    %v355 = vpop.f32.mrf.mxu0
    %v356 = vadd.f32 %v257, %v355
    %v357 = vpop.f32.mrf.mxu0
    %v358 = vpop.f32.mrf.mxu0
    %v359 = vadd.f32 %v262, %v358
    %v360 = vpop.f32.mrf.mxu0
    %361 = vdwg.mxu0
    %v362 = vmax.f32 %v332, 0.0
    %v363 = vmax.f32 %v335, 0.0
    %v364 = vmax.f32 %v340, 0.0
    %v365 = vmax.f32 %v343, 0.0
    %v366 = vmax.f32 %v348, 0.0
    %v367 = vmax.f32 %v351, 0.0
    %v368 = vmax.f32 %v356, 0.0
    %v369 = vmax.f32 %v359, 0.0
    %v370 = vld [vmem:[%s5] sm:$0xf]
    %v371 = vld [vmem:[%s5 + $0x4] sm:$0xf]
    %v372 = vld [vmem:[%s5 + $0x8] sm:$0xf]
    %v373 = vld [vmem:[%s5 + $0xc] sm:$0xf]
    %v374 = vld [vmem:[%s5 + $0x10] sm:$0xf]
    %v375 = vld [vmem:[%s5 + $0x14] sm:$0xf]
    %v376 = vld [vmem:[%s5 + $0x18] sm:$0xf]
    %v377 = vld [vmem:[%s5 + $0x1c] sm:$0xf]
    %v378 = vpack.c.bf16 %v363, %v362
    %v379 = vpack.c.bf16 %v365, %v364
    %v380 = vpack.c.bf16 %v367, %v366
    %v381 = vpack.c.bf16 %v369, %v368
    %v382 = vld [vmem:[%s6] sm:$0xff]
    %v383 = vld [vmem:[%s6 + $0x8] sm:$0xff]
    %v384 = vld [vmem:[%s6 + $0x10] sm:$0xff]
    %v385 = vld [vmem:[%s6 + $0x18] sm:$0xff]
    %v386 = vld [vmem:[%s6 + $0x20] sm:$0xff]
    %v387 = vld [vmem:[%s6 + $0x28] sm:$0xff]
    %v388 = vld [vmem:[%s6 + $0x30] sm:$0xff]
    %v389 = vld [vmem:[%s6 + $0x38] sm:$0xff]
    %391 = vset.pattern.permute.xlu0 0
    %392 = vperm.xlu0 %391, %v382
    %v393 = vpop.permute.xlu0 %392
    %396 = vset.pattern.permute.xlu0 0
    %397 = vperm.xlu0 %396, %v383
    %v398 = vpop.permute.xlu0 %397
    %401 = vset.pattern.permute.xlu0 0
    %402 = vperm.xlu0 %401, %v384
    %v403 = vpop.permute.xlu0 %402
    %406 = vset.pattern.permute.xlu0 0
    %407 = vperm.xlu0 %406, %v385
    %v408 = vpop.permute.xlu0 %407
    %411 = vset.pattern.permute.xlu0 0
    %412 = vperm.xlu0 %411, %v386
    %v413 = vpop.permute.xlu0 %412
    %416 = vset.pattern.permute.xlu0 0
    %417 = vperm.xlu0 %416, %v387
    %v418 = vpop.permute.xlu0 %417
    %421 = vset.pattern.permute.xlu0 0
    %422 = vperm.xlu0 %421, %v388
    %v423 = vpop.permute.xlu0 %422
    %426 = vset.pattern.permute.xlu0 0
    %427 = vperm.xlu0 %426, %v389
    %v428 = vpop.permute.xlu0 %427
    %v438 = vunpack.c.l.b16 %v370
    %v439 = vunpack.c.l.b16 %v371
    %v440 = vunpack.c.l.b16 %v372
    %v441 = vunpack.c.l.b16 %v373
    %v442 = vunpack.c.l.b16 %v374
    %v443 = vunpack.c.l.b16 %v375
    %v444 = vunpack.c.l.b16 %v376
    %v445 = vunpack.c.l.b16 %v377
    %v446 = vpack.c.b16 %v439, %v438
    %v447 = vpack.c.b16 %v441, %v440
    %v448 = vpack.c.b16 %v443, %v442
    %v449 = vpack.c.b16 %v445, %v444
    %v451 = vsel %vm284, %v446, 0
    %v454 = vsel %vm284, %v447, 0
    %v457 = vsel %vm284, %v448, 0
    %v460 = vsel %vm284, %v449, 0
    %462 = vmatprep.subr.bf16.mxu0 0
    %463 = vmatpush1.bf16.msra.mxu0 0
    %464 = vmatprep.subr.bf16.mxu0 0
    %465 = vmatpush1.bf16.msra.mxu0 0
    %466 = vmatprep.subr.bf16.mxu0 0
    %467 = vmatpush1.bf16.msra.mxu0 0
    %468 = vmatprep.subr.bf16.mxu0 0
    %469 = vmatpush1.bf16.msra.mxu0 0
    %470 = vmatprep.subr.bf16.mxu0 0
    %471 = vmatpush1.bf16.msra.mxu0 %v381
    %472 = vmatprep.subr.bf16.mxu0 0
    %473 = vmatpush1.bf16.msra.mxu0 %v380
    %474 = vmatprep.subr.bf16.mxu0 0
    %475 = vmatpush1.bf16.msra.mxu0 %v379
    %476 = vmatprep.subr.bf16.mxu0 0
    %477 = vmatpush1.bf16.msra.mxu0 %v378
    %478 = vmatprep.subr.bf16.mxu0 0
    %479 = vmatpush2.bf16.msra.mxu0 0
    %480 = vmatprep.subr.bf16.mxu0 0
    %481 = vmatpush2.bf16.msra.mxu0 0
    %482 = vmatprep.subr.bf16.mxu0 0
    %483 = vmatpush2.bf16.msra.mxu0 0
    %484 = vmatprep.subr.bf16.mxu0 0
    %485 = vmatpush2.bf16.msra.mxu0 0
    %486 = vmatprep.subr.bf16.mxu0 0
    %487 = vmatpush2.bf16.msra.mxu0 0
    %488 = vmatprep.subr.bf16.mxu0 0
    %489 = vmatpush2.bf16.msra.mxu0 0
    %490 = vmatprep.subr.bf16.mxu0 0
    %491 = vmatpush2.bf16.msra.mxu0 0
    %492 = vmatprep.subr.bf16.mxu0 0
    %493 = vmatpush2.bf16.msra.mxu0 0
    %494 = vmatprep.mubr.bf16.mxu0 0
    %495 = vmatmul.mubr.bf16.gmra.mxu0 %v451
    %v496 = vpop.f32.mrf.mxu0
    %v497 = vadd.f32 %v393, %v496
    %v498 = vpop.f32.mrf.mxu0
    %v499 = vpop.f32.mrf.mxu0
    %v500 = vadd.f32 %v398, %v499
    %v501 = vpop.f32.mrf.mxu0
    %502 = vmatprep.mubr.bf16.mxu0 0
    %503 = vmatmul.mubr.bf16.gmra.mxu0 %v454
    %v504 = vpop.f32.mrf.mxu0
    %v505 = vadd.f32 %v403, %v504
    %v506 = vpop.f32.mrf.mxu0
    %v507 = vpop.f32.mrf.mxu0
    %v508 = vadd.f32 %v408, %v507
    %v509 = vpop.f32.mrf.mxu0
    %510 = vmatprep.mubr.bf16.mxu0 0
    %511 = vmatmul.mubr.bf16.gmra.mxu0 %v457
    %v512 = vpop.f32.mrf.mxu0
    %v513 = vadd.f32 %v413, %v512
    %v514 = vpop.f32.mrf.mxu0
    %v515 = vpop.f32.mrf.mxu0
    %v516 = vadd.f32 %v418, %v515
    %v517 = vpop.f32.mrf.mxu0
    %518 = vmatprep.mubr.bf16.mxu0 0
    %519 = vmatmul.mubr.bf16.gmra.mxu0 %v460
    %v520 = vpop.f32.mrf.mxu0
    %v521 = vadd.f32 %v423, %v520
    %v522 = vpop.f32.mrf.mxu0
    %v523 = vpop.f32.mrf.mxu0
    %v524 = vadd.f32 %v428, %v523
    %v525 = vpop.f32.mrf.mxu0
    %526 = vdwg.mxu0
    %v527 = vmax.f32 %v497, 0.0
    %v528 = vmax.f32 %v500, 0.0
    %v529 = vmax.f32 %v505, 0.0
    %v530 = vmax.f32 %v508, 0.0
    %v531 = vmax.f32 %v513, 0.0
    %v532 = vmax.f32 %v516, 0.0
    %v533 = vmax.f32 %v521, 0.0
    %v534 = vmax.f32 %v524, 0.0
    %v535 = vld [vmem:[%s7] sm:$0x3]
    %v536 = vpack.c.bf16 %v528, %v527
    %v537 = vpack.c.bf16 %v530, %v529
    %v538 = vpack.c.bf16 %v532, %v531
    %v539 = vpack.c.bf16 %v534, %v533
    %v540 = vld [vmem:[%s8] sm:$0xf]
    %542 = vset.pattern.permute.xlu0 0
    %543 = vperm.xlu0 %542, %v540
    %v544 = vpop.permute.xlu0 %543
    %v547 = vsel %vm284, %v535, 0
    %549 = vmatprep.subr.bf16.mxu0 0
    %550 = vmatpush1.bf16.msra.mxu0 0
    %551 = vmatprep.subr.bf16.mxu0 0
    %552 = vmatpush1.bf16.msra.mxu0 0
    %553 = vmatprep.subr.bf16.mxu0 0
    %554 = vmatpush1.bf16.msra.mxu0 0
    %555 = vmatprep.subr.bf16.mxu0 0
    %556 = vmatpush1.bf16.msra.mxu0 0
    %557 = vmatprep.subr.bf16.mxu0 0
    %558 = vmatpush1.bf16.msra.mxu0 %v539
    %559 = vmatprep.subr.bf16.mxu0 0
    %560 = vmatpush1.bf16.msra.mxu0 %v538
    %561 = vmatprep.subr.bf16.mxu0 0
    %562 = vmatpush1.bf16.msra.mxu0 %v537
    %563 = vmatprep.subr.bf16.mxu0 0
    %564 = vmatpush1.bf16.msra.mxu0 %v536
    %565 = vmatprep.subr.bf16.mxu0 0
    %566 = vmatpush2.bf16.msra.mxu0 0
    %567 = vmatprep.subr.bf16.mxu0 0
    %568 = vmatpush2.bf16.msra.mxu0 0
    %569 = vmatprep.subr.bf16.mxu0 0
    %570 = vmatpush2.bf16.msra.mxu0 0
    %571 = vmatprep.subr.bf16.mxu0 0
    %572 = vmatpush2.bf16.msra.mxu0 0
    %573 = vmatprep.subr.bf16.mxu0 0
    %574 = vmatpush2.bf16.msra.mxu0 0
    %575 = vmatprep.subr.bf16.mxu0 0
    %576 = vmatpush2.bf16.msra.mxu0 0
    %577 = vmatprep.subr.bf16.mxu0 0
    %578 = vmatpush2.bf16.msra.mxu0 0
    %579 = vmatprep.subr.bf16.mxu0 0
    %580 = vmatpush2.bf16.msra.mxu0 0
    %581 = vmatprep.mubr.bf16.mxu0 0
    %582 = vmatmul.mubr.bf16.gmra.mxu0 %v547
    %v583 = vpop.f32.mrf.mxu0
    %v584 = vadd.f32 %v544, %v583
    %v585 = vpop.f32.mrf.mxu0
    %v586 = vpop.f32.mrf.mxu0
    %v587 = vpop.f32.mrf.mxu0
    %588 = vdwg.mxu0
    %589 = vst [vmem:[#allocation2] sm:$0xf] %v584
    // Predicated region
    $region38: #{tpu_custom_call.1} parent=1 // pred_check
      _
    $region39: #{tpu_custom_call.1} parent=1 // pred_check_branch
      %591 = sbr.rel (0) target = $region41
    $region40: #{tpu_custom_call.1} parent=1 // pred_region
      %s593 = ssub.s32 64, 64
      %594 = vsyncadd [#allocation3], %s593
      %s596 = sshll.u32 [#allocation2], 4
      %s597 = int_to_ptr.vmem [resolvable:$true] %s596
      %599 = dma.vmem_to_hbm [thread:$0]  %s597, 64, %s9, [#allocation3]
    $region41: #{tpu_custom_call.1} parent=1 // pred_fallthru
      _
    // Predicated region
    $region42: #{tpu_custom_call.1} parent=1 // pred_check
      _
    $region43: #{tpu_custom_call.1} parent=1 // pred_check_branch
      %601 = sbr.rel (0) target = $region45
    $region44: #{tpu_custom_call.1} parent=1 // pred_region
      %602 = dma.done [#allocation3], 64
    $region45: #{tpu_custom_call.1} parent=1 // pred_fallthru
      _
    %603 = vsyncpa [#allocation3], 1

</llo_original>
